<compile_context>
chip_gen: v7x
topology: tpu7x:2x2x1
jax: 0.10.0
libtpu: 0.0.40
codegen_flags: <defaults>
</compile_context>

<pallas_src>
import numpy as np
import jax
import jax.numpy as jnp
from jax.experimental import pallas as pl
from jax.experimental.pallas import tpu as pltpu


# ----------------------------- Pallas kernel --------------------------------
def make_fused_gcn_kernel(layer_dims, write_layer, n_nodes, cpad):
    """Build a kernel computing all GCN layers for one graph (one grid step).

    layer_dims : list of (f_in, f_out) per layer (static).
    write_layer: list of bool, whether layer l's output goes into the slab.
    n_nodes    : number of nodes N.
    cpad       : lane-dense (multiple-of-128) output slab width.
    """
    num_layers = len(layer_dims)

    def kernel(*refs):
        # refs = (a_ref, x_ref, w0, b0, w1, b1, ..., o_ref)
        a_ref, x_ref = refs[0], refs[1]
        o_ref = refs[-1]

        a = a_ref[0]          # (N, N)  bf16, VMEM-resident for all layers
        h = x_ref[0]          # (N, F0) bf16

        pieces = []
        for l in range(num_layers):
            w = refs[2 + 2 * l][...]        # (f_in, f_out) bf16
            bias = refs[3 + 2 * l][...]     # (1, f_out)    f32
            f_in, f_out = layer_dims[l]
            if f_out <= f_in:
                # contract feature dim first -> N*N matmul runs at width f_out
                hw = jnp.dot(h, w, preferred_element_type=jnp.float32)
                z = jnp.dot(a, hw.astype(jnp.bfloat16),
                            preferred_element_type=jnp.float32)
            else:
                ah = jnp.dot(a, h, preferred_element_type=jnp.float32)
                z = jnp.dot(ah.astype(jnp.bfloat16), w,
                            preferred_element_type=jnp.float32)
            h_f32 = jnp.maximum(z + bias, 0.0)       # bias + ReLU in f32
            if write_layer[l]:
                pieces.append(h_f32)
            h = h_f32.astype(jnp.bfloat16)            # feed next layer (bf16)

        total = sum(p.shape[1] for p in pieces)
        if cpad > total:
            pieces.append(jnp.zeros((n_nodes, cpad - total), jnp.float32))
        slab = pieces[0] if len(pieces) == 1 else jnp.concatenate(pieces, axis=1)
        o_ref[0] = slab                               # single lane-dense store

    return kernel


def fused_gcn_forward(a_hat, x, params, full_receptive_field=True):
    """All GCN layers in one pallas_call.

    a_hat : [B, N, N] normalized adjacency (f32 or bf16)
    x     : [B, N, F0] node features
    params: list of (w [f_in, f_out], b [f_out])
    returns [B, N, total_cols] f32 (total_cols = sum of written layer widths).
    """
    B, N, F0 = x.shape
    num_layers = len(params)
    write_layer = [full_receptive_field or l == num_layers - 1
                   for l in range(num_layers)]
    total_cols = sum(params[l][0].shape[1]
                     for l in range(num_layers) if write_layer[l])
    cpad = max(128, pl.cdiv(total_cols, 128) * 128)   # lane-dense output slab

    operands = [a_hat.astype(jnp.bfloat16), x.astype(jnp.bfloat16)]
    in_specs = [
        pl.BlockSpec((1, N, N), lambda b: (b, 0, 0),
                     memory_space=pltpu.MemorySpace.VMEM),
        pl.BlockSpec((1, N, F0), lambda b: (b, 0, 0),
                     memory_space=pltpu.MemorySpace.VMEM),
    ]
    layer_dims = []
    for (w, bias) in params:
        f_in, f_out = w.shape
        layer_dims.append((f_in, f_out))
        operands.append(w.astype(jnp.bfloat16))
        operands.append(bias.reshape(1, f_out).astype(jnp.float32))
        in_specs.append(pl.BlockSpec((f_in, f_out), lambda b: (0, 0),
                                     memory_space=pltpu.MemorySpace.VMEM))
        in_specs.append(pl.BlockSpec((1, f_out), lambda b: (0, 0),
                                     memory_space=pltpu.MemorySpace.VMEM))

    kernel = make_fused_gcn_kernel(layer_dims, write_layer, N, cpad)

    out = pl.pallas_call(
        kernel,
        out_shape=jax.ShapeDtypeStruct((B, N, cpad), jnp.float32),
        grid=(B,),
        in_specs=in_specs,
        out_specs=pl.BlockSpec((1, N, cpad), lambda b: (b, 0, 0),
                               memory_space=pltpu.MemorySpace.VMEM),
        compiler_params=pltpu.CompilerParams(
            dimension_semantics=("parallel",),       # batch axis -> 2 TCs on v7x
            vmem_limit_bytes=32 * 1024 * 1024,
        ),
    )(*operands)
    return out[:, :, :total_cols]


# ------------------------------- glue (JAX) ----------------------------------
def build_normalized_adj(edge_index, num_nodes):
    """Dense A_hat = D^{-1/2}(A + I)D^{-1/2}, PyG gcn_norm semantics."""
    src = edge_index[0]
    dst = edge_index[1]
    a = jnp.zeros((num_nodes, num_nodes), jnp.float32)
    a = a.at[dst, src].add(1.0)                    # edge j -> i => A[i, j]
    a = a + jnp.eye(num_nodes, dtype=jnp.float32)  # self-loops
    deg = a.sum(axis=1)
    dinv_sqrt = jnp.where(deg > 0.0, 1.0 / jnp.sqrt(deg), 0.0)
    return dinv_sqrt[:, None] * a * dinv_sqrt[None, :]


def init_gcn_module_params(key, input_size, hidden_sizes):
    """Glorot-uniform weights + zero bias per GCNConv layer."""
    sizes = [input_size] + list(hidden_sizes)
    params = []
    for i in range(len(sizes) - 1):
        key, sub = jax.random.split(key)
        fan_in, fan_out = sizes[i], sizes[i + 1]
        limit = np.sqrt(6.0 / (fan_in + fan_out))
        w = jax.random.uniform(sub, (fan_in, fan_out), jnp.float32, -limit, limit)
        b = jnp.zeros((fan_out,), jnp.float32)
        params.append((w, b))
    return params


def agent_indices(node_type, agent_node_types):
    # _get_agent_nodes: isin(node_type, agent_node_types). Data-dependent gather
    # size resolved on host (node_type is concrete).
    idx = np.flatnonzero(np.isin(np.asarray(node_type), np.asarray(agent_node_types)))
    return jnp.asarray(idx, jnp.int32)


def gcn_module_forward(params, x, edge_index, node_type, agent_node_types,
                       full_receptive_field=True):
    """Single-graph forward, mirrors GCNModule.forward (activation = ReLU)."""
    n = x.shape[0]
    a_hat = build_normalized_adj(edge_index, n)
    idx = agent_indices(node_type, agent_node_types)
    slab = fused_gcn_forward(a_hat[None], x[None], params, full_receptive_field)
    # TODO(synk): fold this agent-row gather into the kernel via scalar-prefetched
    # row indices (PrefetchScalarGridSpec) once the agent count is fixed.
    return jnp.take(slab[0], idx, axis=0)


def gcn_reference(a_hat, x, params, full_receptive_field=True):
    """Pure-JAX f32 reference (batched)."""
    h = x
    outs = []
    num_layers = len(params)
    for i, (w, b) in enumerate(params):
        h = jnp.maximum(jnp.einsum("bij,bjf->bif", a_hat, h @ w) + b, 0.0)
        if full_receptive_field or i == num_layers - 1:
            outs.append(h)
    return jnp.concatenate(outs, axis=-1)


# --------------------------------- main ---------------------------------------
if __name__ == "__main__":
    key = jax.random.PRNGKey(0)

    # Small, module-consistent shapes; batched over B parallel-env graphs.
    num_nodes = 8
    input_size = 16
    hidden_sizes = [32, 32]
    agent_node_types = [0]
    full_receptive_field = True
    batch = 4

    k_x, k_p = jax.random.split(key)
    x_b = jax.random.normal(k_x, (batch, num_nodes, input_size), jnp.float32)

    # Per-env deterministic ring graphs (stride b+1, both directions).
    a_hat_list = []
    for b in range(batch):
        src = np.arange(num_nodes)
        dst = (src + 1 + b) % num_nodes
        edge_index_b = jnp.asarray(
            np.stack([np.concatenate([src, dst]), np.concatenate([dst, src])]),
            jnp.int32,
        )
        a_hat_list.append(build_normalized_adj(edge_index_b, num_nodes))
    a_hat_b = jnp.stack(a_hat_list, axis=0)          # [B, N, N]

    # Node types shared across envs; agents are type 0 -> nodes 0, 2, 4, 6.
    node_type = jnp.asarray([0, 1, 0, 2, 0, 1, 0, 2], jnp.int32)
    idx = agent_indices(node_type, agent_node_types)

    params = init_gcn_module_params(k_p, input_size, hidden_sizes)

    # ---- batched fused kernel: one pallas_call for all layers, all graphs ----
    slab = fused_gcn_forward(a_hat_b, x_b, params, full_receptive_field)
    slab = jax.block_until_ready(slab)               # [B, N, sum(hidden)]
    out_b = jnp.take(slab, idx, axis=1)              # [B, n_agents, sum(hidden)]
    out_b = jax.block_until_ready(out_b)

    expected_cols = sum(hidden_sizes) if full_receptive_field else hidden_sizes[-1]
    assert slab.shape == (batch, num_nodes, expected_cols), slab.shape
    assert out_b.shape == (batch, 4, expected_cols), out_b.shape
    assert bool(jnp.all(jnp.isfinite(out_b)))

    # ---- correctness vs. pure-JAX f32 reference (bf16 matmuls, f32 accum) ----
    ref = gcn_reference(a_hat_b, x_b, params, full_receptive_field)
    assert bool(jnp.allclose(slab, ref, rtol=0.1, atol=0.1)), "mismatch vs reference"

    # ---- single-graph module-faithful path (graph 0) -------------------------
    src = np.arange(num_nodes)
    dst = (src + 1) % num_nodes
    edge_index0 = jnp.asarray(
        np.stack([np.concatenate([src, dst]), np.concatenate([dst, src])]),
        jnp.int32,
    )
    out0 = gcn_module_forward(params, x_b[0], edge_index0, node_type,
                              agent_node_types, full_receptive_field)
    out0 = jax.block_until_ready(out0)
    assert out0.shape == (4, expected_cols), out0.shape
    assert bool(jnp.allclose(out0, out_b[0], rtol=0.05, atol=0.05))

    print("KERNEL_OK")
</pallas_src>

<mosaic_0001>
module attributes {stable_mosaic.version = 11 : i64} {
  func.func @kernel(%arg0: i32, %arg1: memref<1x8x8xbf16, #tpu.memory_space<vmem>>, %arg2: memref<1x8x16xbf16, #tpu.memory_space<vmem>>, %arg3: memref<16x32xbf16, #tpu.memory_space<vmem>>, %arg4: memref<1x32xf32, #tpu.memory_space<vmem>>, %arg5: memref<32x32xbf16, #tpu.memory_space<vmem>>, %arg6: memref<1x32xf32, #tpu.memory_space<vmem>>, %arg7: memref<1x8x128xf32, #tpu.memory_space<vmem>>) attributes {dimension_semantics = [#tpu.dimension_semantics<parallel>], iteration_bounds = array<i64: 4>, scalar_prefetch = 0 : i64, scratch_operands = 0 : i64, tpu.core_type = #tpu.core_type<tc>, window_params = [{transform_indices = @transform_0, window_bounds = array<i64: 1, 8, 8>}, {transform_indices = @transform_1, window_bounds = array<i64: 1, 8, 16>}, {pipeline_mode = #tpu.pipeline_mode<synchronous>, transform_indices = @transform_2, window_bounds = array<i64: 16, 32>}, {pipeline_mode = #tpu.pipeline_mode<synchronous>, transform_indices = @transform_3, window_bounds = array<i64: 1, 32>}, {pipeline_mode = #tpu.pipeline_mode<synchronous>, transform_indices = @transform_4, window_bounds = array<i64: 32, 32>}, {pipeline_mode = #tpu.pipeline_mode<synchronous>, transform_indices = @transform_5, window_bounds = array<i64: 1, 32>}, {transform_indices = @transform_6, window_bounds = array<i64: 1, 8, 128>}]} {
    %c0 = arith.constant 0 : index
    %c0_0 = arith.constant 0 : index
    %c0_1 = arith.constant 0 : index
    %0 = vector.load %arg1[%c0, %c0_0, %c0_1] : memref<1x8x8xbf16, #tpu.memory_space<vmem>>, vector<1x8x8xbf16>
    %1 = vector.shape_cast %0 : vector<1x8x8xbf16> to vector<8x8xbf16>
    %c0_2 = arith.constant 0 : index
    %c0_3 = arith.constant 0 : index
    %c0_4 = arith.constant 0 : index
    %2 = vector.load %arg2[%c0_2, %c0_3, %c0_4] : memref<1x8x16xbf16, #tpu.memory_space<vmem>>, vector<1x8x16xbf16>
    %3 = vector.shape_cast %2 : vector<1x8x16xbf16> to vector<8x16xbf16>
    %c0_5 = arith.constant 0 : index
    %c0_6 = arith.constant 0 : index
    %4 = vector.load %arg3[%c0_5, %c0_6] : memref<16x32xbf16, #tpu.memory_space<vmem>>, vector<16x32xbf16>
    %c0_7 = arith.constant 0 : index
    %c0_8 = arith.constant 0 : index
    %5 = vector.load %arg4[%c0_7, %c0_8] : memref<1x32xf32, #tpu.memory_space<vmem>>, vector<1x32xf32>
    %cst = arith.constant dense<0.000000e+00> : vector<8x16xf32>
    %6 = tpu.matmul %1, %3, %cst {dimension_numbers = #tpu.dot_dimension_numbers<[1], [0], [0], [1], [0, 0, 1, 1], [], []>} : vector<8x8xbf16>, vector<8x16xbf16>, vector<8x16xf32> -> vector<8x16xf32>
    %7 = arith.truncf %6 : vector<8x16xf32> to vector<8x16xbf16>
    %cst_9 = arith.constant dense<0.000000e+00> : vector<8x32xf32>
    %8 = tpu.matmul %7, %4, %cst_9 {dimension_numbers = #tpu.dot_dimension_numbers<[1], [0], [0], [1], [0, 0, 1, 1], [], []>} : vector<8x16xbf16>, vector<16x32xbf16>, vector<8x32xf32> -> vector<8x32xf32>
    %9 = vector.broadcast %5 : vector<1x32xf32> to vector<8x32xf32>
    %10 = arith.addf %8, %9 : vector<8x32xf32>
    %cst_10 = arith.constant 0.000000e+00 : f32
    %11 = vector.broadcast %cst_10 : f32 to vector<8x32xf32>
    %12 = arith.maximumf %10, %11 : vector<8x32xf32>
    %13 = arith.truncf %12 : vector<8x32xf32> to vector<8x32xbf16>
    %c0_11 = arith.constant 0 : index
    %c0_12 = arith.constant 0 : index
    %14 = vector.load %arg5[%c0_11, %c0_12] : memref<32x32xbf16, #tpu.memory_space<vmem>>, vector<32x32xbf16>
    %c0_13 = arith.constant 0 : index
    %c0_14 = arith.constant 0 : index
    %15 = vector.load %arg6[%c0_13, %c0_14] : memref<1x32xf32, #tpu.memory_space<vmem>>, vector<1x32xf32>
    %cst_15 = arith.constant dense<0.000000e+00> : vector<8x32xf32>
    %16 = tpu.matmul %13, %14, %cst_15 {dimension_numbers = #tpu.dot_dimension_numbers<[1], [0], [0], [1], [0, 0, 1, 1], [], []>} : vector<8x32xbf16>, vector<32x32xbf16>, vector<8x32xf32> -> vector<8x32xf32>
    %17 = arith.truncf %16 : vector<8x32xf32> to vector<8x32xbf16>
    %cst_16 = arith.constant dense<0.000000e+00> : vector<8x32xf32>
    %18 = tpu.matmul %1, %17, %cst_16 {dimension_numbers = #tpu.dot_dimension_numbers<[1], [0], [0], [1], [0, 0, 1, 1], [], []>} : vector<8x8xbf16>, vector<8x32xbf16>, vector<8x32xf32> -> vector<8x32xf32>
    %19 = vector.broadcast %15 : vector<1x32xf32> to vector<8x32xf32>
    %20 = arith.addf %18, %19 : vector<8x32xf32>
    %cst_17 = arith.constant 0.000000e+00 : f32
    %21 = vector.broadcast %cst_17 : f32 to vector<8x32xf32>
    %22 = arith.maximumf %20, %21 : vector<8x32xf32>
    %cst_18 = arith.constant 0.000000e+00 : f32
    %23 = vector.broadcast %cst_18 : f32 to vector<8x64xf32>
    %24 = tpu.concatenate %12, %22, %23 in 1 : vector<8x32xf32>, vector<8x32xf32>, vector<8x64xf32> -> vector<8x128xf32>
    %c0_19 = arith.constant 0 : index
    %c0_20 = arith.constant 0 : index
    %c0_21 = arith.constant 0 : index
    %25 = vector.load %arg7[%c0_19, %c0_20, %c0_21] : memref<1x8x128xf32, #tpu.memory_space<vmem>>, vector<1x8x128xf32>
    %26 = vector.shape_cast %25 : vector<1x8x128xf32> to vector<8x128xf32>
    %27 = vector.shape_cast %24 : vector<8x128xf32> to vector<1x8x128xf32>
    tpu.vector_store %arg7[%c0_19, %c0_20, %c0_21], %27 {strides = array<i32>} : memref<1x8x128xf32, #tpu.memory_space<vmem>>, vector<1x8x128xf32>,
    return
  }
  func.func @transform_0(%arg0: i32) -> (i32, i32, i32) {
    %c0_i32 = arith.constant 0 : i32
    %c0_i32_0 = arith.constant 0 : i32
    %c0_i32_1 = arith.constant 0 : i32
    return %arg0, %c0_i32, %c0_i32_0 : i32, i32, i32
  }
  func.func @transform_1(%arg0: i32) -> (i32, i32, i32) {
    %c0_i32 = arith.constant 0 : i32
    %c0_i32_0 = arith.constant 0 : i32
    %c0_i32_1 = arith.constant 0 : i32
    return %arg0, %c0_i32, %c0_i32_0 : i32, i32, i32
  }
  func.func @transform_2(%arg0: i32) -> (i32, i32) {
    %c0_i32 = arith.constant 0 : i32
    %c0_i32_0 = arith.constant 0 : i32
    %c0_i32_1 = arith.constant 0 : i32
    return %c0_i32, %c0_i32_0 : i32, i32
  }
  func.func @transform_3(%arg0: i32) -> (i32, i32) {
    %c0_i32 = arith.constant 0 : i32
    %c0_i32_0 = arith.constant 0 : i32
    %c0_i32_1 = arith.constant 0 : i32
    return %c0_i32, %c0_i32_0 : i32, i32
  }
  func.func @transform_4(%arg0: i32) -> (i32, i32) {
    %c0_i32 = arith.constant 0 : i32
    %c0_i32_0 = arith.constant 0 : i32
    %c0_i32_1 = arith.constant 0 : i32
    return %c0_i32, %c0_i32_0 : i32, i32
  }
  func.func @transform_5(%arg0: i32) -> (i32, i32) {
    %c0_i32 = arith.constant 0 : i32
    %c0_i32_0 = arith.constant 0 : i32
    %c0_i32_1 = arith.constant 0 : i32
    return %c0_i32, %c0_i32_0 : i32, i32
  }
  func.func @transform_6(%arg0: i32) -> (i32, i32, i32) {
    %c0_i32 = arith.constant 0 : i32
    %c0_i32_0 = arith.constant 0 : i32
    %c0_i32_1 = arith.constant 0 : i32
    return %arg0, %c0_i32, %c0_i32_0 : i32, i32, i32
  }
}

</mosaic_0001>

<llo_original>
// kernel: tpu_custom_call.1
$region0: #{tpu_custom_call.1}
  #allocation0 [shape = 'u32[]', space=smem, size = 0x4, offset = 0x4, fixed_abs, tag = 'smem constant byte address 0x4 - core index']
  #allocation1 [shape = 'u32[144,128]{1,0:T(1,128)}', space=vmem, size = 0x12000, scoped, tag = 'internal scratch']
  %s0 = inlined_call_operand.hbm [shape: bf16[4,8,8], index: 0, kind: input, shape index: {}]
  %s1 = inlined_call_operand.hbm [shape: bf16[4,8,16], index: 1, kind: input, shape index: {}]
  %s2 = inlined_call_operand.hbm [shape: bf16[16,32], index: 2, kind: input, shape index: {}]
  %s3 = inlined_call_operand.vmem [shape: f32[1,32], index: 3, kind: input, shape index: {}]
  %s4 = inlined_call_operand.hbm [shape: bf16[32,32], index: 4, kind: input, shape index: {}]
  %s5 = inlined_call_operand.vmem [shape: f32[1,32], index: 5, kind: input, shape index: {}]
  %s6 = inlined_call_operand.hbm [shape: f32[4,8,128], index: 6, kind: output, shape index: {}]
  %s7 = sld [smem:[#allocation0]]
  $region73: #{tpu_custom_call.1} parent=0
    _
  %s9 = ssub.s32 1, %s7
  %s10 = scalar_select 0, %s9, %s7
  $region1: #{tpu_custom_call.1} parent=0
    #allocation2 [shape = 'u8[4096]{0}', space=vmem, size = 0x1000, scoped, tag = 'input window, operand 0']
    #allocation3 [shape = 's32[2]{0}', space=sflag, size = 0x8, scoped, tag = 'scoped memory for tpu_custom_call.1']
    #allocation4 [shape = 's32[2]{0}', space=sflag, size = 0x8, scoped, tag = 'scoped memory for tpu_custom_call.1']
    #allocation5 [shape = 'u8[4096]{0}', space=vmem, size = 0x1000, scoped, tag = 'input window, operand 1']
    #allocation6 [shape = 's32[2]{0}', space=sflag, size = 0x8, scoped, tag = 'scoped memory for tpu_custom_call.1']
    #allocation7 [shape = 'u8[4096]{0}', space=vmem, size = 0x1000, scoped, tag = 'input window, operand 2, single buffered']
    #allocation8 [shape = 'u8[8192]{0}', space=vmem, size = 0x2000, scoped, tag = 'input window, operand 4, single buffered']
    #allocation9 [shape = 's32[1]{0}', space=sflag, size = 0x4, scoped, tag = 'scoped memory for tpu_custom_call.1']
    #allocation10 [shape = 'u8[8192]{0}', space=vmem, size = 0x2000, scoped, tag = 'output window, operand 0']
    %11 = vsyncpa [#allocation3], 0
    %s12 = scalar_lea.sflag [#allocation3], 1
    %13 = vsyncpa %s12, 0
    %14 = vsyncpa [#allocation6], 0
    %s15 = scalar_lea.sflag [#allocation6], 1
    %16 = vsyncpa %s15, 0
    %17 = vsyncpa [#allocation9], 0
    %18 = vsyncpa [#allocation4], 0
    %s19 = scalar_lea.sflag [#allocation4], 1
    %20 = vsyncpa %s19, 0
    loop: start=0, step=1, limit=6
    $region2: #{tpu_custom_call.1} parent=1 // loop_pre_header
      _
    $region3: #{tpu_custom_call.1} parent=1 // loop_header
      %s22 = sphi 0, %s26
      %p23 = scmp.ge.s32.totalorder %s22, 6
      %s32 = sphi 0, %s34
      %s35 = sphi 0, %s32
      %s36 = sphi 0, %s35
      %s52 = sphi 0, %s36
      %s58 = sphi 0, %s60
      %s61 = sphi 0, %s58
      %s62 = sphi 0, %s61
      %s78 = sphi 0, %s62
      %s82 = sphi 0, %s82
      %s84 = sphi 0, %s82
      %s85 = sphi 0, %s84
      %s99 = sphi 0, %s85
      %s103 = sphi 0, %s103
      %s105 = sphi 0, %s103
      %s106 = sphi 0, %s105
      %s120 = sphi 0, %s106
      %s124 = sphi 0, %s124
      %s126 = sphi 0, %s124
      %s127 = sphi 0, %s126
      %s141 = sphi 0, %s127
      %s145 = sphi 0, %s145
      %s147 = sphi 0, %s145
      %s148 = sphi 0, %s147
      %s162 = sphi 0, %s148
      %s168 = sphi 0, %s170
      %s171 = sphi 0, %s168
      %s172 = sphi 0, %s171
      %s188 = sphi 0, %s172
    $region4: #{tpu_custom_call.1} parent=1 // loop_header_branch
      %25 = sbr.rel (%p23) target = $region8
    $region5: #{tpu_custom_call.1} parent=1 // loop_body
      %s27 = ssub.s32 %s22, 1
      %s28 = ssub.s32 %s22, 2
      %s29 = sadd.s32 %s22, 1
      %s30 = ssub.s32 %s22, %s29
      %p31 = scmp.eq.s32.totalorder %s30, 0
      %s33 = sadd.s32 %s32, 1
      %s34 = scalar_select %p31, %s32, %s33
      %p37 = pneg %p31
      %p38 = scmp.eq.s32.totalorder %s22, 3
      %p39 = por %p37, %p38
      %p40 = scmp.ne.s32.totalorder %s32, %s35
      %p41 = scmp.eq.s32.totalorder %s22, 0
      %p42 = por %p40, %p41
      %p43 = scmp.ne.s32.totalorder %s32, %s35
      %p44 = scmp.eq.s32.totalorder %s27, 3
      %p45 = por %p43, %p44
      %p46 = scmp.ne.s32.totalorder %s35, %s36
      %p47 = scmp.eq.s32.totalorder %s27, 0
      %p48 = por %p46, %p47
      %p49 = scmp.ne.s32.totalorder %s35, %s36
      %p50 = scmp.eq.s32.totalorder %s28, 3
      %p51 = por %p49, %p50
      %p53 = scmp.ne.s32.totalorder %s36, %s52
      %p54 = scmp.eq.s32.totalorder %s28, 0
      %p55 = por %p53, %p54
      %s56 = ssub.s32 %s22, %s29
      %p57 = scmp.eq.s32.totalorder %s56, 0
      %s59 = sadd.s32 %s58, 1
      %s60 = scalar_select %p57, %s58, %s59
      %p63 = pneg %p57
      %p64 = scmp.eq.s32.totalorder %s22, 3
      %p65 = por %p63, %p64
      %p66 = scmp.ne.s32.totalorder %s58, %s61
      %p67 = scmp.eq.s32.totalorder %s22, 0
      %p68 = por %p66, %p67
      %p69 = scmp.ne.s32.totalorder %s58, %s61
      %p70 = scmp.eq.s32.totalorder %s27, 3
      %p71 = por %p69, %p70
      %p72 = scmp.ne.s32.totalorder %s61, %s62
      %p73 = scmp.eq.s32.totalorder %s27, 0
      %p74 = por %p72, %p73
      %p75 = scmp.ne.s32.totalorder %s61, %s62
      %p76 = scmp.eq.s32.totalorder %s28, 3
      %p77 = por %p75, %p76
      %p79 = scmp.ne.s32.totalorder %s62, %s78
      %p80 = scmp.eq.s32.totalorder %s28, 0
      %p81 = por %p79, %p80
      %s83 = sadd.s32 %s82, 1
      %p86 = scmp.eq.s32.totalorder %s22, 3
      %p87 = scmp.ne.s32.totalorder %s82, %s84
      %p88 = scmp.eq.s32.totalorder %s22, 0
      %p89 = por %p87, %p88
      %p90 = scmp.ne.s32.totalorder %s82, %s84
      %p91 = scmp.eq.s32.totalorder %s27, 3
      %p92 = por %p90, %p91
      %p93 = scmp.ne.s32.totalorder %s84, %s85
      %p94 = scmp.eq.s32.totalorder %s27, 0
      %p95 = por %p93, %p94
      %p96 = scmp.ne.s32.totalorder %s84, %s85
      %p97 = scmp.eq.s32.totalorder %s28, 3
      %p98 = por %p96, %p97
      %p100 = scmp.ne.s32.totalorder %s85, %s99
      %p101 = scmp.eq.s32.totalorder %s28, 0
      %p102 = por %p100, %p101
      %s104 = sadd.s32 %s103, 1
      %p107 = scmp.eq.s32.totalorder %s22, 3
      %p108 = scmp.ne.s32.totalorder %s103, %s105
      %p109 = scmp.eq.s32.totalorder %s22, 0
      %p110 = por %p108, %p109
      %p111 = scmp.ne.s32.totalorder %s103, %s105
      %p112 = scmp.eq.s32.totalorder %s27, 3
      %p113 = por %p111, %p112
      %p114 = scmp.ne.s32.totalorder %s105, %s106
      %p115 = scmp.eq.s32.totalorder %s27, 0
      %p116 = por %p114, %p115
      %p117 = scmp.ne.s32.totalorder %s105, %s106
      %p118 = scmp.eq.s32.totalorder %s28, 3
      %p119 = por %p117, %p118
      %p121 = scmp.ne.s32.totalorder %s106, %s120
      %p122 = scmp.eq.s32.totalorder %s28, 0
      %p123 = por %p121, %p122
      %s125 = sadd.s32 %s124, 1
      %p128 = scmp.eq.s32.totalorder %s22, 3
      %p129 = scmp.ne.s32.totalorder %s124, %s126
      %p130 = scmp.eq.s32.totalorder %s22, 0
      %p131 = por %p129, %p130
      %p132 = scmp.ne.s32.totalorder %s124, %s126
      %p133 = scmp.eq.s32.totalorder %s27, 3
      %p134 = por %p132, %p133
      %p135 = scmp.ne.s32.totalorder %s126, %s127
      %p136 = scmp.eq.s32.totalorder %s27, 0
      %p137 = por %p135, %p136
      %p138 = scmp.ne.s32.totalorder %s126, %s127
      %p139 = scmp.eq.s32.totalorder %s28, 3
      %p140 = por %p138, %p139
      %p142 = scmp.ne.s32.totalorder %s127, %s141
      %p143 = scmp.eq.s32.totalorder %s28, 0
      %p144 = por %p142, %p143
      %s146 = sadd.s32 %s145, 1
      %p149 = scmp.eq.s32.totalorder %s22, 3
      %p150 = scmp.ne.s32.totalorder %s145, %s147
      %p151 = scmp.eq.s32.totalorder %s22, 0
      %p152 = por %p150, %p151
      %p153 = scmp.ne.s32.totalorder %s145, %s147
      %p154 = scmp.eq.s32.totalorder %s27, 3
      %p155 = por %p153, %p154
      %p156 = scmp.ne.s32.totalorder %s147, %s148
      %p157 = scmp.eq.s32.totalorder %s27, 0
      %p158 = por %p156, %p157
      %p159 = scmp.ne.s32.totalorder %s147, %s148
      %p160 = scmp.eq.s32.totalorder %s28, 3
      %p161 = por %p159, %p160
      %p163 = scmp.ne.s32.totalorder %s148, %s162
      %p164 = scmp.eq.s32.totalorder %s28, 0
      %p165 = por %p163, %p164
      %s166 = ssub.s32 %s22, %s29
      %p167 = scmp.eq.s32.totalorder %s166, 0
      %s169 = sadd.s32 %s168, 1
      %s170 = scalar_select %p167, %s168, %s169
      %p173 = pneg %p167
      %p174 = scmp.eq.s32.totalorder %s22, 3
      %p175 = por %p173, %p174
      %p176 = scmp.ne.s32.totalorder %s168, %s171
      %p177 = scmp.eq.s32.totalorder %s22, 0
      %p178 = por %p176, %p177
      %p179 = scmp.ne.s32.totalorder %s168, %s171
      %p180 = scmp.eq.s32.totalorder %s27, 3
      %p181 = por %p179, %p180
      %p182 = scmp.ne.s32.totalorder %s171, %s172
      %p183 = scmp.eq.s32.totalorder %s27, 0
      %p184 = por %p182, %p183
      %p185 = scmp.ne.s32.totalorder %s171, %s172
      %p186 = scmp.eq.s32.totalorder %s28, 3
      %p187 = por %p185, %p186
      %p189 = scmp.ne.s32.totalorder %s172, %s188
      %p190 = scmp.eq.s32.totalorder %s28, 0
      %p191 = por %p189, %p190
      %p192 = scmp.le.s32.totalorder 1, %s22
      %p193 = scmp.lt.s32.totalorder %s22, 5
      %p194 = pnand %p192, %p193
      %p195 = pneg %p194
      // Predicated region
      $region9: #{tpu_custom_call.1} parent=5 // pred_check
        _
      $region10: #{tpu_custom_call.1} parent=5 // pred_check_branch
        %197 = sbr.rel (%p194) target = $region12
      $region11: #{tpu_custom_call.1} parent=5 // pred_region
        %s198 = ssub.s32 %s22, 1
        // Predicated region
        $region13: #{tpu_custom_call.1} parent=11 // pred_check
          %p199 = pneg %p95
        $region14: #{tpu_custom_call.1} parent=11 // pred_check_branch
          %201 = sbr.rel (%p199) target = $region16
        $region15: #{tpu_custom_call.1} parent=11 // pred_region
          %s203 = ssub.s32 128, 128
          %204 = vsyncadd [#allocation6], %s203
          %s205 = sshll.u32 [#allocation7], 4
          %s206 = int_to_ptr.vmem [resolvable:$true] %s205
          %211 = dma.hbm_to_vmem [thread:$0]  %s2, 128, %s206, [#allocation6], 64, 64, 4
        $region16: #{tpu_custom_call.1} parent=11 // pred_fallthru
          _
        // Predicated region
        $region17: #{tpu_custom_call.1} parent=11 // pred_check
          %p212 = pneg %p116
        $region18: #{tpu_custom_call.1} parent=11 // pred_check_branch
          %214 = sbr.rel (%p212) target = $region20
        $region19: #{tpu_custom_call.1} parent=11 // pred_region
          _
        $region20: #{tpu_custom_call.1} parent=11 // pred_fallthru
          _
        // Predicated region
        $region21: #{tpu_custom_call.1} parent=11 // pred_check
          %p215 = pneg %p137
        $region22: #{tpu_custom_call.1} parent=11 // pred_check_branch
          %217 = sbr.rel (%p215) target = $region24
        $region23: #{tpu_custom_call.1} parent=11 // pred_region
          %s219 = ssub.s32 256, 256
          %220 = vsyncadd [#allocation9], %s219
          %s221 = sshll.u32 [#allocation8], 4
          %s222 = int_to_ptr.vmem [resolvable:$true] %s221
          %227 = dma.hbm_to_vmem [thread:$0]  %s4, 256, %s222, [#allocation9], 64, 64, 4
        $region24: #{tpu_custom_call.1} parent=11 // pred_fallthru
          _
        // Predicated region
        $region25: #{tpu_custom_call.1} parent=11 // pred_check
          %p228 = pneg %p158
        $region26: #{tpu_custom_call.1} parent=11 // pred_check_branch
          %230 = sbr.rel (%p228) target = $region28
        $region27: #{tpu_custom_call.1} parent=11 // pred_region
          _
        $region28: #{tpu_custom_call.1} parent=11 // pred_fallthru
          _
      $region12: #{tpu_custom_call.1} parent=5 // pred_fallthru
        _
      %p231 = scmp.lt.s32.totalorder %s22, 4
      // Predicated region
      $region29: #{tpu_custom_call.1} parent=5 // pred_check
        %p232 = pneg %p231
      $region30: #{tpu_custom_call.1} parent=5 // pred_check_branch
        %234 = sbr.rel (%p232) target = $region32
      $region31: #{tpu_custom_call.1} parent=5 // pred_region
        // Predicated region
        $region33: #{tpu_custom_call.1} parent=31 // pred_check
          %p235 = pneg %p42
        $region34: #{tpu_custom_call.1} parent=31 // pred_check_branch
          %237 = sbr.rel (%p235) target = $region36
        $region35: #{tpu_custom_call.1} parent=31 // pred_region
          %s238 = sand.u32 %s32, 1
          %s239 = scalar_lea.sflag [#allocation3], %s238
          %s240 = sand.u32 %s32, 1
          %s241 = smul.addr %s240, 4
          %s242 = scalar_lea.vmem [#allocation2], %s241
          %s244 = ssub.s32 64, 64
          %245 = vsyncadd %s239, %s244
          %s246 = smul.addr %s22, 64
          %s247 = scalar_lea.hbm %s0, %s246
          %s249 = sshll.u32 %s242, 4
          %s250 = int_to_ptr.vmem [resolvable:$true] %s249
          %252 = dma.hbm_to_vmem [thread:$0]  %s247, 64, %s250, %s239
        $region36: #{tpu_custom_call.1} parent=31 // pred_fallthru
          _
        // Predicated region
        $region37: #{tpu_custom_call.1} parent=31 // pred_check
          %p253 = pneg %p68
        $region38: #{tpu_custom_call.1} parent=31 // pred_check_branch
          %255 = sbr.rel (%p253) target = $region40
        $region39: #{tpu_custom_call.1} parent=31 // pred_region
          %s256 = sand.u32 %s22, 1
          %s257 = scalar_lea.sflag [#allocation6], %s256
          %s258 = sand.u32 %s58, 1
          %s259 = smul.addr %s258, 4
          %s260 = scalar_lea.vmem [#allocation5], %s259
          %s262 = ssub.s32 64, 64
          %263 = vsyncadd %s257, %s262
          %s264 = smul.addr %s22, 64
          %s265 = scalar_lea.hbm %s1, %s264
          %s267 = sshll.u32 %s260, 4
          %s268 = int_to_ptr.vmem [resolvable:$true] %s267
          %270 = dma.hbm_to_vmem [thread:$0]  %s265, 64, %s268, %s257
        $region40: #{tpu_custom_call.1} parent=31 // pred_fallthru
          _
      $region32: #{tpu_custom_call.1} parent=5 // pred_fallthru
        _
      %p271 = scmp.le.s32.totalorder 1, %s22
      %p272 = scmp.lt.s32.totalorder %s22, 5
      %p273 = pnand %p271, %p272
      %p274 = pneg %p273
      // Predicated region
      $region41: #{tpu_custom_call.1} parent=5 // pred_check
        _
      $region42: #{tpu_custom_call.1} parent=5 // pred_check_branch
        %276 = sbr.rel (%p273) target = $region44
      $region43: #{tpu_custom_call.1} parent=5 // pred_region
        %s277 = ssub.s32 %s22, 1
        %s278 = sand.u32 %s35, 1
        %s279 = scalar_lea.sflag [#allocation3], %s278
        %s280 = sand.u32 %s35, 1
        %s281 = smul.addr %s280, 4
        %s282 = scalar_lea.vmem [#allocation2], %s281
        // Predicated region
        $region45: #{tpu_custom_call.1} parent=43 // pred_check
          %p283 = pneg %p48
        $region46: #{tpu_custom_call.1} parent=43 // pred_check_branch
          %285 = sbr.rel (%p283) target = $region48
        $region47: #{tpu_custom_call.1} parent=43 // pred_region
          %286 = dma.done %s279, 64
        $region48: #{tpu_custom_call.1} parent=43 // pred_fallthru
          _
        %s287 = sand.u32 %s27, 1
        %s288 = scalar_lea.sflag [#allocation6], %s287
        %s289 = sand.u32 %s61, 1
        %s290 = smul.addr %s289, 4
        %s291 = scalar_lea.vmem [#allocation5], %s290
        // Predicated region
        $region49: #{tpu_custom_call.1} parent=43 // pred_check
          %p292 = pneg %p74
        $region50: #{tpu_custom_call.1} parent=43 // pred_check_branch
          %294 = sbr.rel (%p292) target = $region52
        $region51: #{tpu_custom_call.1} parent=43 // pred_region
          %295 = dma.done %s288, 64
        $region52: #{tpu_custom_call.1} parent=43 // pred_fallthru
          _
        // Predicated region
        $region53: #{tpu_custom_call.1} parent=43 // pred_check
          %p296 = pneg %p95
        $region54: #{tpu_custom_call.1} parent=43 // pred_check_branch
          %298 = sbr.rel (%p296) target = $region56
        $region55: #{tpu_custom_call.1} parent=43 // pred_region
          %299 = dma.done [#allocation6], 128
        $region56: #{tpu_custom_call.1} parent=43 // pred_fallthru
          _
        // Predicated region
        $region57: #{tpu_custom_call.1} parent=43 // pred_check
          %p300 = pneg %p137
        $region58: #{tpu_custom_call.1} parent=43 // pred_check_branch
          %302 = sbr.rel (%p300) target = $region60
        $region59: #{tpu_custom_call.1} parent=43 // pred_region
          %303 = dma.done [#allocation9], 256
        $region60: #{tpu_custom_call.1} parent=43 // pred_fallthru
          _
        %s304 = sand.u32 %s35, 1
        %s305 = scalar_lea.sflag [#allocation3], %s304
        %s306 = sand.u32 %s35, 1
        %s307 = smul.addr %s306, 4
        %s308 = scalar_lea.vmem [#allocation2], %s307
        %p309 = pneg %p48
        %p310 = pneg %p45
        %s311 = sand.u32 %s27, 1
        %s312 = scalar_lea.sflag [#allocation6], %s311
        %s313 = sand.u32 %s61, 1
        %s314 = smul.addr %s313, 4
        %s315 = scalar_lea.vmem [#allocation5], %s314
        %p316 = pneg %p74
        %p317 = pneg %p71
        %p318 = pneg %p95
        %p319 = pneg %p92
        %p320 = pneg %p116
        %p321 = pneg %p113
        %p322 = pneg %p137
        %p323 = pneg %p134
        %p324 = pneg %p158
        %p325 = pneg %p155
        %p326 = pneg %p184
        %p327 = pneg %p181
        %s328 = sand.u32 %s171, 1
        %s329 = scalar_lea.sflag [#allocation4], %s328
        %s330 = sand.u32 %s171, 1
        %s331 = smul.addr %s330, 8
        %s332 = scalar_lea.vmem [#allocation10], %s331
        %v334 = vld [vmem:[%s282] sm:$0xf]
        %v335 = vld [vmem:[%s291] sm:$0xf]
        %v336 = vld [vmem:[#allocation7] sm:$0xf]
        %v337 = vld [vmem:[#allocation7 + $0x4] sm:$0xf]
        %v338 = vld [vmem:[%s3] sm:$0x1]
        %vm339 = vcmask 64512
        %v341 = vsel %vm339, %v334, 0
        %vm343 = vcmask 1043456
        %v345 = vsel %vm343, %v335, 0
        %347 = vmatprep.subr.bf16.mxu0 0
        %348 = vmatpush1.bf16.msra.mxu0 %v345
        %349 = vmatprep.subr.bf16.mxu0 0
        %350 = vmatpush1.bf16.msra.mxu0 0
        %351 = vmatprep.subr.bf16.mxu0 0
        %352 = vmatpush1.bf16.msra.mxu0 0
        %353 = vmatprep.subr.bf16.mxu0 0
        %354 = vmatpush1.bf16.msra.mxu0 0
        %355 = vmatprep.subr.bf16.mxu0 0
        %356 = vmatpush1.bf16.msra.mxu0 0
        %357 = vmatprep.subr.bf16.mxu0 0
        %358 = vmatpush1.bf16.msra.mxu0 0
        %359 = vmatprep.subr.bf16.mxu0 0
        %360 = vmatpush1.bf16.msra.mxu0 0
        %361 = vmatprep.subr.bf16.mxu0 0
        %362 = vmatpush1.bf16.msra.mxu0 0
        %363 = vmatprep.subr.bf16.mxu0 0
        %364 = vmatpush1.bf16.msra.mxu0 0
        %365 = vmatprep.subr.bf16.mxu0 0
        %366 = vmatpush1.bf16.msra.mxu0 0
        %367 = vmatprep.subr.bf16.mxu0 0
        %368 = vmatpush1.bf16.msra.mxu0 0
        %369 = vmatprep.subr.bf16.mxu0 0
        %370 = vmatpush1.bf16.msra.mxu0 0
        %371 = vmatprep.subr.bf16.mxu0 0
        %372 = vmatpush1.bf16.msra.mxu0 0
        %373 = vmatprep.subr.bf16.mxu0 0
        %374 = vmatpush1.bf16.msra.mxu0 0
        %375 = vmatprep.subr.bf16.mxu0 0
        %376 = vmatpush1.bf16.msra.mxu0 0
        %377 = vmatprep.subr.bf16.mxu0 0
        %378 = vmatpush1.bf16.msra.mxu0 0
        %379 = vmatprep.mubr.bf16.mxu0 0
        %380 = vmatmul.mubr.bf16.gmra.mrb[0].mxu0 %v341
        %v381 = vpop.f32.mrb[0].mxu0
        %v382 = vadd.f32 0.0, %v381
        %v383 = vpop.f32.mrb[0].mxu0
        %v384 = vpop.f32.mrb[0].mxu0
        %v385 = vpop.f32.mrb[0].mxu0
        %386 = vdwg.mxu0
        %v387 = vpack.c.bf16 %v382, %v382
        %v389 = vlaneseq
        %v390 = vshrl.u32 %v389, 7
        %v391 = vsub.s32 0, %v390
        %v392 = vrot.slane %v338, %v391
        %v396 = vunpack.c.l.b16 %v336
        %v397 = vunpack.c.l.b16 %v337
        %v398 = vpack.c.b16 %v397, %v396
        %vm400 = vcmask 130048
        %v402 = vsel %vm400, %v387, 0
        %404 = vmatprep.subr.bf16.mxu0 0
        %405 = vmatpush1.bf16.msra.mxu0 %v398
        %406 = vmatprep.subr.bf16.mxu0 0
        %407 = vmatpush1.bf16.msra.mxu0 0
        %408 = vmatprep.subr.bf16.mxu0 0
        %409 = vmatpush1.bf16.msra.mxu0 0
        %410 = vmatprep.subr.bf16.mxu0 0
        %411 = vmatpush1.bf16.msra.mxu0 0
        %412 = vmatprep.subr.bf16.mxu0 0
        %413 = vmatpush1.bf16.msra.mxu0 0
        %414 = vmatprep.subr.bf16.mxu0 0
        %415 = vmatpush1.bf16.msra.mxu0 0
        %416 = vmatprep.subr.bf16.mxu0 0
        %417 = vmatpush1.bf16.msra.mxu0 0
        %418 = vmatprep.subr.bf16.mxu0 0
        %419 = vmatpush1.bf16.msra.mxu0 0
        %420 = vmatprep.subr.bf16.mxu0 0
        %421 = vmatpush1.bf16.msra.mxu0 0
        %422 = vmatprep.subr.bf16.mxu0 0
        %423 = vmatpush1.bf16.msra.mxu0 0
        %424 = vmatprep.subr.bf16.mxu0 0
        %425 = vmatpush1.bf16.msra.mxu0 0
        %426 = vmatprep.subr.bf16.mxu0 0
        %427 = vmatpush1.bf16.msra.mxu0 0
        %428 = vmatprep.subr.bf16.mxu0 0
        %429 = vmatpush1.bf16.msra.mxu0 0
        %430 = vmatprep.subr.bf16.mxu0 0
        %431 = vmatpush1.bf16.msra.mxu0 0
        %432 = vmatprep.subr.bf16.mxu0 0
        %433 = vmatpush1.bf16.msra.mxu0 0
        %434 = vmatprep.subr.bf16.mxu0 0
        %435 = vmatpush1.bf16.msra.mxu0 0
        %436 = vmatprep.mubr.bf16.mxu0 0
        %437 = vmatmul.mubr.bf16.gmra.mrb[0].mxu0 %v402
        %v438 = vpop.f32.mrb[0].mxu0
        %v439 = vadd.f32 %v392, %v438
        %v440 = vpop.f32.mrb[0].mxu0
        %v441 = vpop.f32.mrb[0].mxu0
        %v442 = vpop.f32.mrb[0].mxu0
        %443 = vdwg.mxu0
        %v444 = vmax.f32 %v439, 0.0
        %v445 = vpack.c.bf16 %v444, %v444
        %v446 = vld [vmem:[#allocation8] sm:$0xf]
        %v447 = vld [vmem:[#allocation8 + $0x4] sm:$0xf]
        %v448 = vld [vmem:[#allocation8 + $0x8] sm:$0xf]
        %v449 = vld [vmem:[#allocation8 + $0xc] sm:$0xf]
        %v450 = vld [vmem:[%s5] sm:$0x1]
        %v455 = vunpack.c.l.b16 %v446
        %v456 = vunpack.c.l.b16 %v447
        %v457 = vunpack.c.l.b16 %v448
        %v458 = vunpack.c.l.b16 %v449
        %v459 = vpack.c.b16 %v456, %v455
        %v460 = vpack.c.b16 %v458, %v457
        %vm463 = vcmask 261120
        %v465 = vsel %vm463, %v445, 0
        %467 = vmatprep.subr.bf16.mxu0 0
        %468 = vmatpush1.bf16.msra.mxu0 %v459
        %469 = vmatprep.subr.bf16.mxu0 0
        %470 = vmatpush1.bf16.msra.mxu0 %v460
        %471 = vmatprep.subr.bf16.mxu0 0
        %472 = vmatpush1.bf16.msra.mxu0 0
        %473 = vmatprep.subr.bf16.mxu0 0
        %474 = vmatpush1.bf16.msra.mxu0 0
        %475 = vmatprep.subr.bf16.mxu0 0
        %476 = vmatpush1.bf16.msra.mxu0 0
        %477 = vmatprep.subr.bf16.mxu0 0
        %478 = vmatpush1.bf16.msra.mxu0 0
        %479 = vmatprep.subr.bf16.mxu0 0
        %480 = vmatpush1.bf16.msra.mxu0 0
        %481 = vmatprep.subr.bf16.mxu0 0
        %482 = vmatpush1.bf16.msra.mxu0 0
        %483 = vmatprep.subr.bf16.mxu0 0
        %484 = vmatpush1.bf16.msra.mxu0 0
        %485 = vmatprep.subr.bf16.mxu0 0
        %486 = vmatpush1.bf16.msra.mxu0 0
        %487 = vmatprep.subr.bf16.mxu0 0
        %488 = vmatpush1.bf16.msra.mxu0 0
        %489 = vmatprep.subr.bf16.mxu0 0
        %490 = vmatpush1.bf16.msra.mxu0 0
        %491 = vmatprep.subr.bf16.mxu0 0
        %492 = vmatpush1.bf16.msra.mxu0 0
        %493 = vmatprep.subr.bf16.mxu0 0
        %494 = vmatpush1.bf16.msra.mxu0 0
        %495 = vmatprep.subr.bf16.mxu0 0
        %496 = vmatpush1.bf16.msra.mxu0 0
        %497 = vmatprep.subr.bf16.mxu0 0
        %498 = vmatpush1.bf16.msra.mxu0 0
        %499 = vmatprep.mubr.bf16.mxu0 0
        %500 = vmatmul.mubr.bf16.gmra.mrb[0].mxu0 %v465
        %v501 = vpop.f32.mrb[0].mxu0
        %v502 = vadd.f32 0.0, %v501
        %v503 = vpop.f32.mrb[0].mxu0
        %v504 = vpop.f32.mrb[0].mxu0
        %v505 = vpop.f32.mrb[0].mxu0
        %506 = vdwg.mxu0
        %v507 = vpack.c.bf16 %v502, %v502
        %v509 = vlaneseq
        %v510 = vshrl.u32 %v509, 7
        %v511 = vsub.s32 0, %v510
        %v512 = vrot.slane %v450, %v511
        %v515 = vsel %vm343, %v507, 0
        %517 = vmatprep.subr.bf16.mxu0 0
        %518 = vmatpush1.bf16.msra.mxu0 %v515
        %519 = vmatprep.subr.bf16.mxu0 0
        %520 = vmatpush1.bf16.msra.mxu0 0
        %521 = vmatprep.subr.bf16.mxu0 0
        %522 = vmatpush1.bf16.msra.mxu0 0
        %523 = vmatprep.subr.bf16.mxu0 0
        %524 = vmatpush1.bf16.msra.mxu0 0
        %525 = vmatprep.subr.bf16.mxu0 0
        %526 = vmatpush1.bf16.msra.mxu0 0
        %527 = vmatprep.subr.bf16.mxu0 0
        %528 = vmatpush1.bf16.msra.mxu0 0
        %529 = vmatprep.subr.bf16.mxu0 0
        %530 = vmatpush1.bf16.msra.mxu0 0
        %531 = vmatprep.subr.bf16.mxu0 0
        %532 = vmatpush1.bf16.msra.mxu0 0
        %533 = vmatprep.subr.bf16.mxu0 0
        %534 = vmatpush1.bf16.msra.mxu0 0
        %535 = vmatprep.subr.bf16.mxu0 0
        %536 = vmatpush1.bf16.msra.mxu0 0
        %537 = vmatprep.subr.bf16.mxu0 0
        %538 = vmatpush1.bf16.msra.mxu0 0
        %539 = vmatprep.subr.bf16.mxu0 0
        %540 = vmatpush1.bf16.msra.mxu0 0
        %541 = vmatprep.subr.bf16.mxu0 0
        %542 = vmatpush1.bf16.msra.mxu0 0
        %543 = vmatprep.subr.bf16.mxu0 0
        %544 = vmatpush1.bf16.msra.mxu0 0
        %545 = vmatprep.subr.bf16.mxu0 0
        %546 = vmatpush1.bf16.msra.mxu0 0
        %547 = vmatprep.subr.bf16.mxu0 0
        %548 = vmatpush1.bf16.msra.mxu0 0
        %549 = vmatprep.mubr.bf16.mxu0 0
        %550 = vmatmul.mubr.bf16.gmra.mrb[0].mxu0 %v341
        %v551 = vpop.f32.mrb[0].mxu0
        %v552 = vadd.f32 %v512, %v551
        %v553 = vpop.f32.mrb[0].mxu0
        %v554 = vpop.f32.mrb[0].mxu0
        %v555 = vpop.f32.mrb[0].mxu0
        %556 = vdwg.mxu0
        %v557 = vmax.f32 %v552, 0.0
        %559 = vrot.lane.b32.xlu0 %v557, 32
        %v560 = vpop.permute.xlu0 %559
        %v562 = vsel %vm463, %v444, %v560
        %vm563 = vcmask 523264
        %v564 = vsel %vm563, %v562, 0.0
        %565 = vst [vmem:[%s332] sm:$0xff] %v564
        %s566 = sand.u32 %s171, 1
        %s567 = scalar_lea.sflag [#allocation4], %s566
        %s568 = sand.u32 %s171, 1
        %s569 = smul.addr %s568, 8
        %s570 = scalar_lea.vmem [#allocation10], %s569
        // Predicated region
        $region61: #{tpu_custom_call.1} parent=43 // pred_check
          %p571 = pneg %p181
        $region62: #{tpu_custom_call.1} parent=43 // pred_check_branch
          %573 = sbr.rel (%p571) target = $region64
        $region63: #{tpu_custom_call.1} parent=43 // pred_region
          %s575 = ssub.s32 128, 128
          %576 = vsyncadd %s567, %s575
          %s577 = smul.addr %s27, 128
          %s578 = scalar_lea.hbm %s6, %s577
          %s580 = sshll.u32 %s570, 4
          %s581 = int_to_ptr.vmem [resolvable:$true] %s580
          %583 = dma.vmem_to_hbm [thread:$0]  %s581, 128, %s578, %s567
        $region64: #{tpu_custom_call.1} parent=43 // pred_fallthru
          _
      $region44: #{tpu_custom_call.1} parent=5 // pred_fallthru
        _
      %p584 = scmp.le.s32.totalorder 2, %s22
      // Predicated region
      $region65: #{tpu_custom_call.1} parent=5 // pred_check
        %p585 = pneg %p584
      $region66: #{tpu_custom_call.1} parent=5 // pred_check_branch
        %587 = sbr.rel (%p585) target = $region68
      $region67: #{tpu_custom_call.1} parent=5 // pred_region
        %s588 = ssub.s32 %s22, 2
        // Predicated region
        $region69: #{tpu_custom_call.1} parent=67 // pred_check
          %p589 = pneg %p187
        $region70: #{tpu_custom_call.1} parent=67 // pred_check_branch
          %591 = sbr.rel (%p589) target = $region72
        $region71: #{tpu_custom_call.1} parent=67 // pred_region
          %s592 = sand.u32 %s172, 1
          %s593 = scalar_lea.sflag [#allocation4], %s592
          %s594 = sand.u32 %s172, 1
          %s595 = smul.addr %s594, 8
          %s596 = scalar_lea.vmem [#allocation10], %s595
          %597 = dma.done %s593, 128
        $region72: #{tpu_custom_call.1} parent=67 // pred_fallthru
          _
      $region68: #{tpu_custom_call.1} parent=5 // pred_fallthru
        _
    $region6: #{tpu_custom_call.1} parent=1 // loop_footer
      %s26 = sadd.s32 1, %s22
    $region7: #{tpu_custom_call.1} parent=1 // loop_footer_branch
      %21 = sbr.rel target = $region3
    $region8: #{tpu_custom_call.1} parent=1 // loop_exit
      _
    %598 = vsyncpa [#allocation3], 1
    %s599 = scalar_lea.sflag [#allocation3], 1
    %600 = vsyncpa %s599, 1
    %601 = vsyncpa [#allocation6], 1
    %s602 = scalar_lea.sflag [#allocation6], 1
    %603 = vsyncpa %s602, 1
    %604 = vsyncpa [#allocation9], 1
    %605 = vsyncpa [#allocation4], 1
    %s606 = scalar_lea.sflag [#allocation4], 1
    %607 = vsyncpa %s606, 1

</llo_original>
